<compile_context>
chip_gen: v6e
topology: v6e:2x2x1
jax: 0.10.0
libtpu: 0.0.40
codegen_flags: <defaults>
</compile_context>

<pallas_src>
import functools

import jax
import jax.numpy as jnp
from jax import lax
from jax.experimental import pallas as pl
from jax.experimental.pallas import tpu as pltpu


# ---------------------------------------------------------------------------
# Kernels
# ---------------------------------------------------------------------------

def _se_fused_kernel(x_ref, w1t_ref, w2t_ref, o_ref, *, inv_b):
    """Single-block path: squeeze + MLP + scale with one HBM read of x."""
    col_sum = jnp.sum(x_ref[...], axis=0, dtype=jnp.float32, keepdims=True)   # (1, C)
    y = col_sum * inv_b
    h = jnp.maximum(
        jnp.dot(y, w1t_ref[...].astype(jnp.float32),
                preferred_element_type=jnp.float32), 0.0)                     # (1, H)
    s = jax.nn.sigmoid(
        jnp.dot(h, w2t_ref[...].astype(jnp.float32),
                preferred_element_type=jnp.float32))                          # (1, C)
    o_ref[...] = (x_ref[...] * s.astype(o_ref.dtype)).astype(o_ref.dtype)


def _se_colsum_kernel(x_ref, sum_ref, *, b_total):
    """Pass 1: f32 column sums, accumulated in the resident (1, C) output."""
    i = pl.program_id(0)

    @pl.when(i == 0)
    def _():
        sum_ref[...] = jnp.zeros_like(sum_ref)

    # Row-mask the (possibly ragged) edge tile so out-of-bounds rows read by
    # the block DMA never reach the accumulator.  For full tiles the mask is
    # all-true; the select is one VPU op per vreg, hidden under the DMA.
    tb = x_ref.shape[0]
    row = lax.broadcasted_iota(jnp.int32, x_ref.shape, 0) + i * tb
    xm = jnp.where(row < b_total, x_ref[...], 0)
    sum_ref[...] += jnp.sum(xm, axis=0, dtype=jnp.float32, keepdims=True)


def _se_scale_kernel(x_ref, s_ref, o_ref):
    """Pass 2: elementwise x * s (s already cast to x.dtype in the wrapper)."""
    o_ref[...] = (x_ref[...] * s_ref[...]).astype(o_ref.dtype)


# ---------------------------------------------------------------------------
# Wrapper
# ---------------------------------------------------------------------------

def _vmem_capacity_bytes():
    try:
        return int(pltpu.get_tpu_info().vmem_capacity_bytes)
    except Exception:
        return 64 * 1024 * 1024   # conservative (v7x-sized per-TC) fallback


def _round_up(n, m):
    return (n + m - 1) // m * m


def se_attention(x, w1, w2, *, force_tiled=False, tile_rows=None):
    """SEAttention forward.

    x : (B, C)        activations
    w1: (C//r, C)     first Linear weight  (PyTorch layout, no bias)
    w2: (C, C//r)     second Linear weight (PyTorch layout, no bias)
    """
    B, C = x.shape
    H = w1.shape[0]
    assert w1.shape == (H, C) and w2.shape == (C, H)
    # TODO(synk): if C is ever not a multiple of 128, pad the channel axis
    # (x and both weights) upstream so output stores stay lane-dense;
    # correctness does not need it because every block spans the full C axis.

    itemsize = jnp.dtype(x.dtype).itemsize
    x_bytes = B * C * itemsize
    w_bytes = 2 * C * H * jnp.dtype(w1.dtype).itemsize
    vmem_cap = _vmem_capacity_bytes()
    # Generation-aware scoped-VMEM request: 64 MiB on v5e/v6e (128 MiB
    # physical), 32 MiB on v7x (64 MiB physical per TensorCore).
    vmem_limit = int(min(vmem_cap // 2, 64 * 1024 * 1024))
    inv_b = 1.0 / float(B)

    # ------------------- fused single-pass path (small x) -------------------
    # grid=(1,) => no DMA/compute overlap, so this is latency-regime only; it
    # reads x from HBM once instead of twice.  Footprint includes the 2x
    # double-buffering Pallas applies to in/out blocks even at grid=(1,).
    fused_footprint = 4 * x_bytes + 2 * w_bytes
    if ((not force_tiled)
            and x_bytes <= 2 * 1024 * 1024
            and fused_footprint <= vmem_limit // 2):
        kernel = functools.partial(_se_fused_kernel, inv_b=inv_b)
        return pl.pallas_call(
            kernel,
            out_shape=jax.ShapeDtypeStruct((B, C), x.dtype),
            grid=(1,),
            in_specs=[
                pl.BlockSpec((B, C), lambda i: (0, 0)),
                pl.BlockSpec((C, H), lambda i: (0, 0)),
                pl.BlockSpec((H, C), lambda i: (0, 0)),
            ],
            out_specs=pl.BlockSpec((B, C), lambda i: (0, 0)),
            compiler_params=pltpu.CompilerParams(
                dimension_semantics=("arbitrary",),
                vmem_limit_bytes=vmem_limit),
        )(x, w1.T, w2.T)

    # ---------------------- two-pass tiled path (large x) -------------------
    # Byte-based, generation-aware tile size: 1-2+ MiB blocks stream near the
    # HBM roofline and amortize the ~0.35 us per-grid-step overhead.
    target_tile_bytes = (4 * 1024 * 1024 if vmem_cap > (96 << 20)
                         else 2 * 1024 * 1024)
    row_bytes = C * itemsize
    tb = max(8, (target_tile_bytes // row_bytes) // 8 * 8)
    # Pass-2 VMEM ~= 2 in + 2 out tile buffers (+ tiny s); keep under limit.
    max_tb = max(8, ((vmem_limit // 5) // row_bytes) // 8 * 8)
    tb = int(min(tb, max_tb, _round_up(B, 8)))
    if tile_rows is not None:                       # test / tuning override
        tb = max(8, (int(tile_rows) // 8) * 8)
    n_tiles = pl.cdiv(B, tb)

    # Pass 1: batch-tiled column-sum reduction.  No jnp.pad of x; the ragged
    # edge tile is row-masked in-kernel.  Output block stays resident across
    # the grid (accumulator), written back to HBM once.
    colsum = pl.pallas_call(
        functools.partial(_se_colsum_kernel, b_total=B),
        out_shape=jax.ShapeDtypeStruct((1, C), jnp.float32),
        grid=(n_tiles,),
        in_specs=[pl.BlockSpec((tb, C), lambda i: (i, 0))],
        out_specs=pl.BlockSpec((1, C), lambda i: (0, 0)),
        compiler_params=pltpu.CompilerParams(
            dimension_semantics=("arbitrary",),
            vmem_limit_bytes=vmem_limit),
    )(x)
    # TODO(synk): on v7x, a leading size-2 "parallel" core axis with per-core
    # partial sums (summed in the wrapper) would let both TensorCores stream
    # pass 1; not needed on v5e/v6e (single TC).

    # Tiny excitation MLP in plain JAX (negligible FLOPs); keeps the weights
    # out of pass-1 VMEM and casts s to x.dtype exactly once.
    y = colsum * jnp.float32(inv_b)                                       # (1, C)
    h = jnp.maximum(y @ w1.T.astype(jnp.float32), 0.0)                    # (1, H)
    s = jax.nn.sigmoid(h @ w2.T.astype(jnp.float32)).astype(x.dtype)      # (1, C)

    # Pass 2: batch-tiled scale; no pad, no output slice — out-of-bounds
    # writes of the ragged edge block are dropped.  "parallel" lets v7x shard
    # the tiles across both TensorCores.
    out = pl.pallas_call(
        _se_scale_kernel,
        out_shape=jax.ShapeDtypeStruct((B, C), x.dtype),
        grid=(n_tiles,),
        in_specs=[
            pl.BlockSpec((tb, C), lambda i: (i, 0)),
            pl.BlockSpec((1, C), lambda i: (0, 0)),
        ],
        out_specs=pl.BlockSpec((tb, C), lambda i: (i, 0)),
        compiler_params=pltpu.CompilerParams(
            dimension_semantics=("parallel",),
            vmem_limit_bytes=vmem_limit),
    )(x, s)
    return out


# ---------------------------------------------------------------------------
# Pure-JAX reference mirroring the PyTorch forward
# ---------------------------------------------------------------------------

def se_attention_ref(x, w1, w2):
    y = jnp.mean(x.astype(jnp.float32), axis=0, keepdims=True)
    y = jnp.maximum(y @ w1.T.astype(jnp.float32), 0.0)
    y = jax.nn.sigmoid(y @ w2.T.astype(jnp.float32))
    return (x.astype(jnp.float32) * y).astype(x.dtype)


if __name__ == "__main__":
    key = jax.random.PRNGKey(0)
    kx, k1, k2, kx2, k3, k4 = jax.random.split(key, 6)

    # --- small shape consistent with the module (in_channels=128, r=4) ------
    B, C, R = 8, 128, 4
    H = C // R
    x = jax.random.normal(kx, (B, C), dtype=jnp.float32)
    w1 = jax.random.normal(k1, (H, C), dtype=jnp.float32) * (1.0 / jnp.sqrt(C))
    w2 = jax.random.normal(k2, (C, H), dtype=jnp.float32) * (1.0 / jnp.sqrt(H))

    out = jax.block_until_ready(se_attention(x, w1, w2))
    ref = jax.block_until_ready(se_attention_ref(x, w1, w2))
    assert out.shape == (B, C)
    assert jnp.allclose(out, ref, atol=1e-5, rtol=1e-5), "fused path mismatch"

    # --- larger, non-multiple-of-tile batch: tiled path with ragged edge ----
    B2, C2, H2 = 1003, 256, 64
    x2 = jax.random.normal(kx2, (B2, C2), dtype=jnp.float32)
    w1b = jax.random.normal(k3, (H2, C2), dtype=jnp.float32) * (1.0 / jnp.sqrt(C2))
    w2b = jax.random.normal(k4, (C2, H2), dtype=jnp.float32) * (1.0 / jnp.sqrt(H2))

    out2 = jax.block_until_ready(
        se_attention(x2, w1b, w2b, force_tiled=True, tile_rows=128))
    ref2 = jax.block_until_ready(se_attention_ref(x2, w1b, w2b))
    assert out2.shape == (B2, C2)
    assert jnp.allclose(out2, ref2, atol=1e-4, rtol=1e-4), "tiled path mismatch"

    # Same path at the auto-selected (byte-based) tile size.
    out3 = jax.block_until_ready(se_attention(x2, w1b, w2b, force_tiled=True))
    assert jnp.allclose(out3, ref2, atol=1e-4, rtol=1e-4), "auto-tile mismatch"

    print("KERNEL_OK")
</pallas_src>

<mosaic_0001>
module attributes {stable_mosaic.version = 11 : i64} {
  func.func @_se_fused_kernel(%arg0: i32, %arg1: memref<8x128xf32, #tpu.memory_space<vmem>>, %arg2: memref<128x32xf32, #tpu.memory_space<vmem>>, %arg3: memref<32x128xf32, #tpu.memory_space<vmem>>, %arg4: memref<8x128xf32, #tpu.memory_space<vmem>>) attributes {dimension_semantics = [#tpu.dimension_semantics<arbitrary>], iteration_bounds = array<i64: 1>, scalar_prefetch = 0 : i64, scratch_operands = 0 : i64, tpu.core_type = #tpu.core_type<tc>, window_params = [{pipeline_mode = #tpu.pipeline_mode<synchronous>, transform_indices = @transform_0, window_bounds = array<i64: 8, 128>}, {pipeline_mode = #tpu.pipeline_mode<synchronous>, transform_indices = @transform_1, window_bounds = array<i64: 128, 32>}, {pipeline_mode = #tpu.pipeline_mode<synchronous>, transform_indices = @transform_2, window_bounds = array<i64: 32, 128>}, {pipeline_mode = #tpu.pipeline_mode<synchronous>, transform_indices = @transform_3, window_bounds = array<i64: 8, 128>}]} {
    %c0 = arith.constant 0 : index
    %c0_0 = arith.constant 0 : index
    %0 = vector.load %arg1[%c0, %c0_0] : memref<8x128xf32, #tpu.memory_space<vmem>>, vector<8x128xf32>
    %cst = arith.constant dense<0.000000e+00> : vector<128xf32>
    %1 = vector.multi_reduction <add>, %0, %cst [0] : vector<8x128xf32> to vector<128xf32>
    %2 = vector.shape_cast %1 : vector<128xf32> to vector<1x128xf32>
    %cst_1 = arith.constant 1.250000e-01 : f32
    %3 = vector.broadcast %cst_1 : f32 to vector<1x128xf32>
    %4 = arith.mulf %2, %3 : vector<1x128xf32>
    %c0_2 = arith.constant 0 : index
    %c0_3 = arith.constant 0 : index
    %5 = vector.load %arg2[%c0_2, %c0_3] : memref<128x32xf32, #tpu.memory_space<vmem>>, vector<128x32xf32>
    %cst_4 = arith.constant dense<0.000000e+00> : vector<1x32xf32>
    %6 = tpu.matmul %4, %5, %cst_4 {dimension_numbers = #tpu.dot_dimension_numbers<[1], [0], [0], [1], [0, 0, 1, 1], [], []>} : vector<1x128xf32>, vector<128x32xf32>, vector<1x32xf32> -> vector<1x32xf32>
    %cst_5 = arith.constant 0.000000e+00 : f32
    %7 = vector.broadcast %cst_5 : f32 to vector<1x32xf32>
    %8 = arith.maximumf %6, %7 : vector<1x32xf32>
    %c0_6 = arith.constant 0 : index
    %c0_7 = arith.constant 0 : index
    %9 = vector.load %arg3[%c0_6, %c0_7] : memref<32x128xf32, #tpu.memory_space<vmem>>, vector<32x128xf32>
    %cst_8 = arith.constant dense<0.000000e+00> : vector<1x128xf32>
    %10 = tpu.matmul %8, %9, %cst_8 {dimension_numbers = #tpu.dot_dimension_numbers<[1], [0], [0], [1], [0, 0, 1, 1], [], []>} : vector<1x32xf32>, vector<32x128xf32>, vector<1x128xf32> -> vector<1x128xf32>
    %11 = arith.negf %10 : vector<1x128xf32>
    %12 = math.exp %11 : vector<1x128xf32>
    %cst_9 = arith.constant 1.000000e+00 : f32
    %13 = vector.broadcast %cst_9 : f32 to vector<1x128xf32>
    %14 = arith.addf %13, %12 : vector<1x128xf32>
    %15 = arith.divf %13, %14 : vector<1x128xf32>
    %c0_10 = arith.constant 0 : index
    %c0_11 = arith.constant 0 : index
    %16 = vector.load %arg1[%c0_10, %c0_11] : memref<8x128xf32, #tpu.memory_space<vmem>>, vector<8x128xf32>
    %17 = vector.broadcast %15 : vector<1x128xf32> to vector<8x128xf32>
    %18 = arith.mulf %16, %17 : vector<8x128xf32>
    %c0_12 = arith.constant 0 : index
    %c0_13 = arith.constant 0 : index
    %19 = vector.load %arg4[%c0_12, %c0_13] : memref<8x128xf32, #tpu.memory_space<vmem>>, vector<8x128xf32>
    tpu.vector_store %arg4[%c0_12, %c0_13], %18 {strides = array<i32>} : memref<8x128xf32, #tpu.memory_space<vmem>>, vector<8x128xf32>,
    return
  }
  func.func @transform_0(%arg0: i32) -> (i32, i32) {
    %c0_i32 = arith.constant 0 : i32
    %c0_i32_0 = arith.constant 0 : i32
    %c0_i32_1 = arith.constant 0 : i32
    return %c0_i32, %c0_i32_0 : i32, i32
  }
  func.func @transform_1(%arg0: i32) -> (i32, i32) {
    %c0_i32 = arith.constant 0 : i32
    %c0_i32_0 = arith.constant 0 : i32
    %c0_i32_1 = arith.constant 0 : i32
    return %c0_i32, %c0_i32_0 : i32, i32
  }
  func.func @transform_2(%arg0: i32) -> (i32, i32) {
    %c0_i32 = arith.constant 0 : i32
    %c0_i32_0 = arith.constant 0 : i32
    %c0_i32_1 = arith.constant 0 : i32
    return %c0_i32, %c0_i32_0 : i32, i32
  }
  func.func @transform_3(%arg0: i32) -> (i32, i32) {
    %c0_i32 = arith.constant 0 : i32
    %c0_i32_0 = arith.constant 0 : i32
    %c0_i32_1 = arith.constant 0 : i32
    return %c0_i32, %c0_i32_0 : i32, i32
  }
}

</mosaic_0001>

<llo_original>
// kernel: tpu_custom_call.1
$region0: #{tpu_custom_call.1}
  #allocation0 [shape = 'u32[]', space=smem, size = 0x4, offset = 0x4, fixed_abs, tag = 'smem constant byte address 0x4 - core index']
  #allocation1 [shape = 'u32[144,128]{1,0:T(1,128)}', space=vmem, size = 0x12000, scoped, tag = 'internal scratch']
  %s0 = inlined_call_operand.vmem [shape: f32[8,128], index: 0, kind: input, shape index: {}]
  %s1 = inlined_call_operand.vmem [shape: f32[128,32], index: 1, kind: input, shape index: {}]
  %s2 = inlined_call_operand.vmem [shape: f32[32,128], index: 2, kind: input, shape index: {}]
  %s3 = inlined_call_operand.hbm [shape: f32[8,128], index: 3, kind: output, shape index: {}]
  %s4 = sld [smem:[#allocation0]]
  $region22: #{tpu_custom_call.1} parent=0
    _
  %s6 = ssub.s32 1, %s4
  %s7 = scalar_select 0, %s6, %s4
  $region1: #{tpu_custom_call.1} parent=0
    #allocation2 [shape = 'u8[4096]{0}', space=vmem, size = 0x1000, scoped, tag = 'output window, operand 0, single buffered']
    #allocation3 [shape = 's32[1]{0}', space=sflag, size = 0x4, scoped, tag = 'scoped memory for tpu_custom_call.1']
    %8 = vsyncpa [#allocation3], 0
    // Predicated region
    $region2: #{tpu_custom_call.1} parent=1 // pred_check
      _
    $region3: #{tpu_custom_call.1} parent=1 // pred_check_branch
      %10 = sbr.rel (0) target = $region5
    $region4: #{tpu_custom_call.1} parent=1 // pred_region
      _
    $region5: #{tpu_custom_call.1} parent=1 // pred_fallthru
      _
    // Predicated region
    $region6: #{tpu_custom_call.1} parent=1 // pred_check
      _
    $region7: #{tpu_custom_call.1} parent=1 // pred_check_branch
      %12 = sbr.rel (0) target = $region9
    $region8: #{tpu_custom_call.1} parent=1 // pred_region
      _
    $region9: #{tpu_custom_call.1} parent=1 // pred_fallthru
      _
    // Predicated region
    $region10: #{tpu_custom_call.1} parent=1 // pred_check
      _
    $region11: #{tpu_custom_call.1} parent=1 // pred_check_branch
      %14 = sbr.rel (0) target = $region13
    $region12: #{tpu_custom_call.1} parent=1 // pred_region
      _
    $region13: #{tpu_custom_call.1} parent=1 // pred_fallthru
      _
    %v15 = vld [vmem:[%s0] sm:$0xff]
    %v16 = vrot.slane %v15, 4
    %v17 = vadd.f32 %v15, %v16
    %v18 = vrot.slane %v17, 2
    %v19 = vadd.f32 %v17, %v18
    %v20 = vrot.slane %v19, 1
    %v21 = vadd.f32 %v19, %v20
    %v22 = vmul.f32 %v21, 0.125
    %v23 = vld [vmem:[%s1] sm:$0xff]
    %v24 = vld [vmem:[%s1 + $0x8] sm:$0xff]
    %v25 = vld [vmem:[%s1 + $0x10] sm:$0xff]
    %v26 = vld [vmem:[%s1 + $0x18] sm:$0xff]
    %v27 = vld [vmem:[%s1 + $0x20] sm:$0xff]
    %v28 = vld [vmem:[%s1 + $0x28] sm:$0xff]
    %v29 = vld [vmem:[%s1 + $0x30] sm:$0xff]
    %v30 = vld [vmem:[%s1 + $0x38] sm:$0xff]
    %v31 = vld [vmem:[%s1 + $0x40] sm:$0xff]
    %v32 = vld [vmem:[%s1 + $0x48] sm:$0xff]
    %v33 = vld [vmem:[%s1 + $0x50] sm:$0xff]
    %v34 = vld [vmem:[%s1 + $0x58] sm:$0xff]
    %v35 = vld [vmem:[%s1 + $0x60] sm:$0xff]
    %v36 = vld [vmem:[%s1 + $0x68] sm:$0xff]
    %v37 = vld [vmem:[%s1 + $0x70] sm:$0xff]
    %v38 = vld [vmem:[%s1 + $0x78] sm:$0xff]
    %39 = vmatprep.subr.mxu0 0.0
    %40 = vmatpush1.msra.mxu0 %v38
    %41 = vmatprep.subr.mxu0 0.0
    %42 = vmatpush1.msra.mxu0 %v37
    %43 = vmatprep.subr.mxu0 0.0
    %44 = vmatpush1.msra.mxu0 %v36
    %45 = vmatprep.subr.mxu0 0.0
    %46 = vmatpush1.msra.mxu0 %v35
    %47 = vmatprep.subr.mxu0 0.0
    %48 = vmatpush1.msra.mxu0 %v34
    %49 = vmatprep.subr.mxu0 0.0
    %50 = vmatpush1.msra.mxu0 %v33
    %51 = vmatprep.subr.mxu0 0.0
    %52 = vmatpush1.msra.mxu0 %v32
    %53 = vmatprep.subr.mxu0 0.0
    %54 = vmatpush1.msra.mxu0 %v31
    %55 = vmatprep.subr.mxu0 0.0
    %56 = vmatpush1.msra.mxu0 %v30
    %57 = vmatprep.subr.mxu0 0.0
    %58 = vmatpush1.msra.mxu0 %v29
    %59 = vmatprep.subr.mxu0 0.0
    %60 = vmatpush1.msra.mxu0 %v28
    %61 = vmatprep.subr.mxu0 0.0
    %62 = vmatpush1.msra.mxu0 %v27
    %63 = vmatprep.subr.mxu0 0.0
    %64 = vmatpush1.msra.mxu0 %v26
    %65 = vmatprep.subr.mxu0 0.0
    %66 = vmatpush1.msra.mxu0 %v25
    %67 = vmatprep.subr.mxu0 0.0
    %68 = vmatpush1.msra.mxu0 %v24
    %69 = vmatprep.subr.mxu0 0.0
    %70 = vmatpush1.msra.mxu0 %v23
    %71 = vmatprep.subr.mxu0 0.0
    %72 = vmatpush2.msra.mxu0 0.0
    %73 = vmatprep.subr.mxu0 0.0
    %74 = vmatpush2.msra.mxu0 0.0
    %75 = vmatprep.subr.mxu0 0.0
    %76 = vmatpush2.msra.mxu0 0.0
    %77 = vmatprep.subr.mxu0 0.0
    %78 = vmatpush2.msra.mxu0 0.0
    %79 = vmatprep.subr.mxu0 0.0
    %80 = vmatpush2.msra.mxu0 0.0
    %81 = vmatprep.subr.mxu0 0.0
    %82 = vmatpush2.msra.mxu0 0.0
    %83 = vmatprep.subr.mxu0 0.0
    %84 = vmatpush2.msra.mxu0 0.0
    %85 = vmatprep.subr.mxu0 0.0
    %86 = vmatpush2.msra.mxu0 0.0
    %87 = vmatprep.subr.mxu0 0.0
    %88 = vmatpush2.msra.mxu0 0.0
    %89 = vmatprep.subr.mxu0 0.0
    %90 = vmatpush2.msra.mxu0 0.0
    %91 = vmatprep.subr.mxu0 0.0
    %92 = vmatpush2.msra.mxu0 0.0
    %93 = vmatprep.subr.mxu0 0.0
    %94 = vmatpush2.msra.mxu0 0.0
    %95 = vmatprep.subr.mxu0 0.0
    %96 = vmatpush2.msra.mxu0 0.0
    %97 = vmatprep.subr.mxu0 0.0
    %98 = vmatpush2.msra.mxu0 0.0
    %99 = vmatprep.subr.mxu0 0.0
    %100 = vmatpush2.msra.mxu0 0.0
    %101 = vmatprep.subr.mxu0 0.0
    %102 = vmatpush2.msra.mxu0 0.0
    %103 = vmatprep.mubr.f32.mxu0 0.0
    %104 = vmatmul.mubr.f32.gmra.mxu0 %v22
    %v105 = vpop.f32.mrf.mxu0
    %v106 = vadd.f32 0.0, %v105
    %v107 = vpop.f32.mrf.mxu0
    %108 = vdwg.mxu0
    %v109 = vmax.f32 %v106, 0.0
    %v110 = vld [vmem:[%s2] sm:$0xff]
    %v111 = vld [vmem:[%s2 + $0x8] sm:$0xff]
    %v112 = vld [vmem:[%s2 + $0x10] sm:$0xff]
    %v113 = vld [vmem:[%s2 + $0x18] sm:$0xff]
    %vm114 = vcmask 261120
    %v116 = vsel %vm114, %v109, 0
    %118 = vmatprep.subr.mxu0 0.0
    %119 = vmatpush1.msra.mxu0 0.0
    %120 = vmatprep.subr.mxu0 0.0
    %121 = vmatpush1.msra.mxu0 0.0
    %122 = vmatprep.subr.mxu0 0.0
    %123 = vmatpush1.msra.mxu0 0.0
    %124 = vmatprep.subr.mxu0 0.0
    %125 = vmatpush1.msra.mxu0 0.0
    %126 = vmatprep.subr.mxu0 0.0
    %127 = vmatpush1.msra.mxu0 0.0
    %128 = vmatprep.subr.mxu0 0.0
    %129 = vmatpush1.msra.mxu0 0.0
    %130 = vmatprep.subr.mxu0 0.0
    %131 = vmatpush1.msra.mxu0 0.0
    %132 = vmatprep.subr.mxu0 0.0
    %133 = vmatpush1.msra.mxu0 0.0
    %134 = vmatprep.subr.mxu0 0.0
    %135 = vmatpush1.msra.mxu0 0.0
    %136 = vmatprep.subr.mxu0 0.0
    %137 = vmatpush1.msra.mxu0 0.0
    %138 = vmatprep.subr.mxu0 0.0
    %139 = vmatpush1.msra.mxu0 0.0
    %140 = vmatprep.subr.mxu0 0.0
    %141 = vmatpush1.msra.mxu0 0.0
    %142 = vmatprep.subr.mxu0 0.0
    %143 = vmatpush1.msra.mxu0 %v113
    %144 = vmatprep.subr.mxu0 0.0
    %145 = vmatpush1.msra.mxu0 %v112
    %146 = vmatprep.subr.mxu0 0.0
    %147 = vmatpush1.msra.mxu0 %v111
    %148 = vmatprep.subr.mxu0 0.0
    %149 = vmatpush1.msra.mxu0 %v110
    %150 = vmatprep.subr.mxu0 0.0
    %151 = vmatpush2.msra.mxu0 0.0
    %152 = vmatprep.subr.mxu0 0.0
    %153 = vmatpush2.msra.mxu0 0.0
    %154 = vmatprep.subr.mxu0 0.0
    %155 = vmatpush2.msra.mxu0 0.0
    %156 = vmatprep.subr.mxu0 0.0
    %157 = vmatpush2.msra.mxu0 0.0
    %158 = vmatprep.subr.mxu0 0.0
    %159 = vmatpush2.msra.mxu0 0.0
    %160 = vmatprep.subr.mxu0 0.0
    %161 = vmatpush2.msra.mxu0 0.0
    %162 = vmatprep.subr.mxu0 0.0
    %163 = vmatpush2.msra.mxu0 0.0
    %164 = vmatprep.subr.mxu0 0.0
    %165 = vmatpush2.msra.mxu0 0.0
    %166 = vmatprep.subr.mxu0 0.0
    %167 = vmatpush2.msra.mxu0 0.0
    %168 = vmatprep.subr.mxu0 0.0
    %169 = vmatpush2.msra.mxu0 0.0
    %170 = vmatprep.subr.mxu0 0.0
    %171 = vmatpush2.msra.mxu0 0.0
    %172 = vmatprep.subr.mxu0 0.0
    %173 = vmatpush2.msra.mxu0 0.0
    %174 = vmatprep.subr.mxu0 0.0
    %175 = vmatpush2.msra.mxu0 0.0
    %176 = vmatprep.subr.mxu0 0.0
    %177 = vmatpush2.msra.mxu0 0.0
    %178 = vmatprep.subr.mxu0 0.0
    %179 = vmatpush2.msra.mxu0 0.0
    %180 = vmatprep.subr.mxu0 0.0
    %181 = vmatpush2.msra.mxu0 0.0
    %182 = vmatprep.mubr.f32.mxu0 0.0
    %183 = vmatmul.mubr.f32.gmra.mxu0 %v116
    %v184 = vpop.f32.mrf.mxu0
    %v185 = vadd.f32 0.0, %v184
    %v186 = vpop.f32.mrf.mxu0
    %187 = vdwg.mxu0
    %v188 = vxor.u32 %v185, 2147483648
    %v189 = vmul.f32 %v188, 1.442695
    %v190 = vpow.pop %v189
    %v191 = vadd.f32 %v190, 1.0
    %v192 = vrcp.pop %v191
    %v193 = vmul.f32 1.0, %v192
    %v194 = vlaneseq
    %v195 = vshrl.u32 %v194, 7
    %v196 = vsub.s32 0, %v195
    %v197 = vrot.slane %v193, %v196
    %v198 = vmul.f32 %v15, %v197
    %199 = vst [vmem:[#allocation2] sm:$0xff] %v198
    // Predicated region
    $region14: #{tpu_custom_call.1} parent=1 // pred_check
      _
    $region15: #{tpu_custom_call.1} parent=1 // pred_check_branch
      %201 = sbr.rel (0) target = $region17
    $region16: #{tpu_custom_call.1} parent=1 // pred_region
      %s203 = ssub.s32 128, 128
      %204 = vsyncadd [#allocation3], %s203
      %s206 = sshll.u32 [#allocation2], 4
      %s207 = int_to_ptr.vmem [resolvable:$true] %s206
      %209 = dma.vmem_to_hbm [thread:$0]  %s207, 128, %s3, [#allocation3]
    $region17: #{tpu_custom_call.1} parent=1 // pred_fallthru
      _
    // Predicated region
    $region18: #{tpu_custom_call.1} parent=1 // pred_check
      _
    $region19: #{tpu_custom_call.1} parent=1 // pred_check_branch
      %211 = sbr.rel (0) target = $region21
    $region20: #{tpu_custom_call.1} parent=1 // pred_region
      %212 = dma.done [#allocation3], 128
    $region21: #{tpu_custom_call.1} parent=1 // pred_fallthru
      _
    %213 = vsyncpa [#allocation3], 1

</llo_original>
